<compile_context>
chip_gen: v7x
topology: tpu7x:2x2x1
jax: 0.10.0
libtpu: 0.0.40
codegen_flags: <defaults>
</compile_context>

<pallas_src>
import jax
import jax.numpy as jnp
from jax.experimental import pallas as pl
from jax.experimental.pallas import tpu as pltpu  # noqa: F401  (TPU backend)

# ----------------------------- configuration --------------------------------
B = 2            # batch (number of language texts)
S = 8            # sequence length after (synthetic) tokenization
D = 128          # hidden / embedding dim (synthetic stand-in for 768)
H = 4            # attention heads
DH = D // H      # per-head dim
F = 256          # FFN intermediate dim
VOCAB = 1000     # synthetic vocab size
MEL_T = 46       # mel_spec_dim[1] (proj_layer output dim; unused in forward)
LN_EPS = 1e-12   # BERT LayerNorm eps
SCALE = 1.0 / float(DH) ** 0.5


def _layernorm(x, g, b):
    mu = jnp.mean(x, axis=-1, keepdims=True)
    var = jnp.mean((x - mu) ** 2, axis=-1, keepdims=True)
    return (x - mu) * jax.lax.rsqrt(var + LN_EPS) * g + b


def _bf16(x):
    return x.astype(jnp.bfloat16)


# ------------------------------- kernel --------------------------------------
def bert_cls_kernel(
    x_ref,                                   # (B*S, D) f32 summed embeddings
    emb_g_ref, emb_b_ref,                    # embedding LayerNorm
    wqkv_ref, bqkv_ref,                      # fused QKV proj (bf16 / f32 bias)
    e_ref, et_ref,                           # (D,H)/(H,D) head one-hot (bf16)
    wo_ref, bo_ref,                          # attention output projection
    ln1_g_ref, ln1_b_ref,                    # post-attention LayerNorm
    w1_ref, b1_ref, w2_ref, b2_ref,          # FFN
    ln2_g_ref, ln2_b_ref,                    # post-FFN LayerNorm
    out_ref,                                 # (B, D) CLS hidden states
):
    # Embedding LayerNorm (BERT applies LN right after summed embeddings).
    x = _layernorm(x_ref[...], emb_g_ref[...], emb_b_ref[...])      # (B*S, D)

    # Fused QKV projection: one (B*S, D) x (D, 3D) matmul, bf16 operands,
    # f32 accumulation.
    qkv = (
        jnp.dot(_bf16(x), wqkv_ref[...], preferred_element_type=jnp.float32)
        + bqkv_ref[...]
    )                                                                # (B*S, 3D)

    # Lane slices at 128-aligned offsets (full-tile slices, no masked loads).
    q = qkv[:, 0 * D:1 * D]                                          # (B*S, D)
    k = qkv[:, 1 * D:2 * D]
    v = qkv[:, 2 * D:3 * D]

    # --- CLS-query multi-head attention, all batches/heads at once ----------
    # scores[b*S+s, h] = SCALE * sum_{d in head h} q_cls[b, d] * k[b*S+s, d]
    q_cls3 = q.reshape(B, S, D)[:, 0:1, :]                           # (B, 1, D)
    prod = (q_cls3 * k.reshape(B, S, D)).reshape(B * S, D)           # (B*S, D)
    scores = jnp.dot(_bf16(prod), e_ref[...],
                     preferred_element_type=jnp.float32) * SCALE     # (B*S, H)

    # Per-batch, per-head softmax over the S key positions (sublane reduce).
    s3 = scores.reshape(B, S, H)
    s3 = s3 - jnp.max(s3, axis=1, keepdims=True)
    p = jnp.exp(s3)
    p = p * pl.reciprocal(jnp.sum(p, axis=1, keepdims=True), approx=True)

    # Context: expand each head's prob across its DH-lane group, weight V,
    # reduce over the S key rows of each batch.
    p_big = jnp.dot(_bf16(p.reshape(B * S, H)), et_ref[...],
                    preferred_element_type=jnp.float32)              # (B*S, D)
    ctx = (p_big * v).reshape(B, S, D).sum(axis=1)                   # (B, D)

    # Attention output projection + residual with the CLS embedding rows.
    attn = (
        jnp.dot(_bf16(ctx), wo_ref[...], preferred_element_type=jnp.float32)
        + bo_ref[...]
    )                                                                # (B, D)
    x_cls = x.reshape(B, S, D)[:, 0:1, :].reshape(B, D)              # (B, D)
    h1 = _layernorm(x_cls + attn, ln1_g_ref[...], ln1_b_ref[...])

    # Feed-forward network (CLS rows only) with GELU.
    ff = (
        jnp.dot(_bf16(h1), w1_ref[...], preferred_element_type=jnp.float32)
        + b1_ref[...]
    )
    ff = jax.nn.gelu(ff, approximate=True)
    ff = (
        jnp.dot(_bf16(ff), w2_ref[...], preferred_element_type=jnp.float32)
        + b2_ref[...]
    )

    out_ref[...] = _layernorm(
        h1 + ff, ln2_g_ref[...], ln2_b_ref[...]).astype(out_ref.dtype)


# ------------------------------ wrapper --------------------------------------
@jax.jit
def language_embedding_forward(token_ids, params):
    """Returns the [CLS] hidden state, shape (B, D)."""
    # Embedding lookup + position + token-type embeddings (glue, plain JAX),
    # folded to a single (B*S, D) slab.
    emb = (
        params["word_emb"][token_ids]                      # (B, S, D)
        + params["pos_emb"][None, :S, :]
        + params["type_emb"][None, :, :]                   # token_type_id = 0
    ).astype(jnp.float32)
    x = emb.reshape(B * S, D)

    # Fuse Q/K/V weights and biases; store matmul weights as bf16 for the MXU.
    wqkv = _bf16(jnp.concatenate(
        [params["wq"], params["wk"], params["wv"]], axis=1))          # (D, 3D)
    bqkv = jnp.concatenate(
        [params["bq"], params["bk"], params["bv"]], axis=1)           # (1, 3D)

    # Head-group one-hot matrices so the kernel never slices sub-128-lane
    # head chunks: e[d, h] = 1 iff lane d belongs to head h.
    head_of_lane = jnp.arange(D, dtype=jnp.int32) // DH
    e = (head_of_lane[:, None]
         == jnp.arange(H, dtype=jnp.int32)[None, :]).astype(jnp.bfloat16)
    et = e.T                                                          # (H, D)

    weights = (
        params["emb_ln_g"], params["emb_ln_b"],
        wqkv, bqkv,
        e, et,
        _bf16(params["wo"]), params["bo"],
        params["ln1_g"], params["ln1_b"],
        _bf16(params["w1"]), params["b1"],
        _bf16(params["w2"]), params["b2"],
        params["ln2_g"], params["ln2_b"],
    )

    # Single grid step (grid=()): activations + ~130 KiB of weights all fit in
    # VMEM, so no pipelining / BlockSpec tiling is needed; output is only the
    # lane-dense (B, D) CLS slab.
    return pl.pallas_call(
        bert_cls_kernel,
        out_shape=jax.ShapeDtypeStruct((B, D), jnp.float32),
    )(x, *weights)


# ---------------------------- parameter init ---------------------------------
def init_params(key):
    ks = iter(jax.random.split(key, 16))
    std = 0.02

    def normal(k, shape):
        return (std * jax.random.normal(k, shape)).astype(jnp.float32)

    return {
        "word_emb": normal(next(ks), (VOCAB, D)),
        "pos_emb": normal(next(ks), (S, D)),
        "type_emb": normal(next(ks), (1, D)),
        "emb_ln_g": jnp.ones((1, D), jnp.float32),
        "emb_ln_b": jnp.zeros((1, D), jnp.float32),
        "wq": normal(next(ks), (D, D)), "bq": jnp.zeros((1, D), jnp.float32),
        "wk": normal(next(ks), (D, D)), "bk": jnp.zeros((1, D), jnp.float32),
        "wv": normal(next(ks), (D, D)), "bv": jnp.zeros((1, D), jnp.float32),
        "wo": normal(next(ks), (D, D)), "bo": jnp.zeros((1, D), jnp.float32),
        "ln1_g": jnp.ones((1, D), jnp.float32),
        "ln1_b": jnp.zeros((1, D), jnp.float32),
        "w1": normal(next(ks), (D, F)), "b1": jnp.zeros((1, F), jnp.float32),
        "w2": normal(next(ks), (F, D)), "b2": jnp.zeros((1, D), jnp.float32),
        "ln2_g": jnp.ones((1, D), jnp.float32),
        "ln2_b": jnp.zeros((1, D), jnp.float32),
        # proj_layer = nn.Linear(embedding_dim, mel_spec_dim[1]); defined in
        # __init__ but NOT used in forward (kept for parity with the module).
        "proj_w": normal(next(ks), (D, MEL_T)),
        "proj_b": jnp.zeros((1, MEL_T), jnp.float32),
    }


# --------------------------------- main ---------------------------------------
if __name__ == "__main__":
    key = jax.random.PRNGKey(0)
    k_tok, k_params = jax.random.split(key)

    # Synthetic "tokenized language text": (B, S) int token ids.
    token_ids = jax.random.randint(k_tok, (B, S), minval=0, maxval=VOCAB)
    params = init_params(k_params)

    cls_embedding = language_embedding_forward(token_ids, params)
    jax.block_until_ready(cls_embedding)

    assert cls_embedding.shape == (B, D), cls_embedding.shape
    assert bool(jnp.all(jnp.isfinite(cls_embedding)))
    print("KERNEL_OK")
</pallas_src>

<mosaic_0001>
module attributes {stable_mosaic.version = 11 : i64} {
  func.func @bert_cls_kernel(%arg0: memref<16x128xf32, #tpu.memory_space<vmem>>, %arg1: memref<1x128xf32, #tpu.memory_space<vmem>>, %arg2: memref<1x128xf32, #tpu.memory_space<vmem>>, %arg3: memref<128x384xbf16, #tpu.memory_space<vmem>>, %arg4: memref<1x384xf32, #tpu.memory_space<vmem>>, %arg5: memref<128x4xbf16, #tpu.memory_space<vmem>>, %arg6: memref<4x128xbf16, #tpu.memory_space<vmem>>, %arg7: memref<128x128xbf16, #tpu.memory_space<vmem>>, %arg8: memref<1x128xf32, #tpu.memory_space<vmem>>, %arg9: memref<1x128xf32, #tpu.memory_space<vmem>>, %arg10: memref<1x128xf32, #tpu.memory_space<vmem>>, %arg11: memref<128x256xbf16, #tpu.memory_space<vmem>>, %arg12: memref<1x256xf32, #tpu.memory_space<vmem>>, %arg13: memref<256x128xbf16, #tpu.memory_space<vmem>>, %arg14: memref<1x128xf32, #tpu.memory_space<vmem>>, %arg15: memref<1x128xf32, #tpu.memory_space<vmem>>, %arg16: memref<1x128xf32, #tpu.memory_space<vmem>>, %arg17: memref<2x128xf32, #tpu.memory_space<vmem>>) attributes {dimension_semantics = [], scalar_prefetch = 0 : i64, scratch_operands = 0 : i64, tpu.core_type = #tpu.core_type<tc>} {
    %c0 = arith.constant 0 : index
    %c0_0 = arith.constant 0 : index
    %0 = vector.load %arg0[%c0, %c0_0] : memref<16x128xf32, #tpu.memory_space<vmem>>, vector<16x128xf32>
    %c0_1 = arith.constant 0 : index
    %c0_2 = arith.constant 0 : index
    %1 = vector.load %arg1[%c0_1, %c0_2] : memref<1x128xf32, #tpu.memory_space<vmem>>, vector<1x128xf32>
    %c0_3 = arith.constant 0 : index
    %c0_4 = arith.constant 0 : index
    %2 = vector.load %arg2[%c0_3, %c0_4] : memref<1x128xf32, #tpu.memory_space<vmem>>, vector<1x128xf32>
    %cst = arith.constant dense<0.000000e+00> : vector<16xf32>
    %3 = vector.multi_reduction <add>, %0, %cst [1] : vector<16x128xf32> to vector<16xf32>
    %4 = vector.shape_cast %3 : vector<16xf32> to vector<16x1xf32>
    %cst_5 = arith.constant 1.280000e+02 : f32
    %5 = vector.broadcast %cst_5 : f32 to vector<16x1xf32>
    %6 = arith.divf %4, %5 : vector<16x1xf32>
    %7 = vector.broadcast %6 : vector<16x1xf32> to vector<16x128xf32>
    %8 = arith.subf %0, %7 : vector<16x128xf32>
    %9 = arith.mulf %8, %8 : vector<16x128xf32>
    %cst_6 = arith.constant dense<0.000000e+00> : vector<16xf32>
    %10 = vector.multi_reduction <add>, %9, %cst_6 [1] : vector<16x128xf32> to vector<16xf32>
    %11 = vector.shape_cast %10 : vector<16xf32> to vector<16x1xf32>
    %cst_7 = arith.constant 1.280000e+02 : f32
    %12 = vector.broadcast %cst_7 : f32 to vector<16x1xf32>
    %13 = arith.divf %11, %12 : vector<16x1xf32>
    %14 = vector.broadcast %6 : vector<16x1xf32> to vector<16x128xf32>
    %15 = arith.subf %0, %14 : vector<16x128xf32>
    %cst_8 = arith.constant 9.99999996E-13 : f32
    %16 = vector.broadcast %cst_8 : f32 to vector<16x1xf32>
    %17 = arith.addf %13, %16 : vector<16x1xf32>
    %18 = math.rsqrt %17 : vector<16x1xf32>
    %19 = vector.broadcast %18 : vector<16x1xf32> to vector<16x128xf32>
    %20 = arith.mulf %15, %19 : vector<16x128xf32>
    %21 = vector.broadcast %1 : vector<1x128xf32> to vector<16x128xf32>
    %22 = arith.mulf %20, %21 : vector<16x128xf32>
    %23 = vector.broadcast %2 : vector<1x128xf32> to vector<16x128xf32>
    %24 = arith.addf %22, %23 : vector<16x128xf32>
    %25 = arith.truncf %24 : vector<16x128xf32> to vector<16x128xbf16>
    %c0_9 = arith.constant 0 : index
    %c0_10 = arith.constant 0 : index
    %26 = vector.load %arg3[%c0_9, %c0_10] : memref<128x384xbf16, #tpu.memory_space<vmem>>, vector<128x384xbf16>
    %cst_11 = arith.constant dense<0.000000e+00> : vector<16x384xf32>
    %27 = tpu.matmul %25, %26, %cst_11 {dimension_numbers = #tpu.dot_dimension_numbers<[1], [0], [0], [1], [0, 0, 1, 1], [], []>} : vector<16x128xbf16>, vector<128x384xbf16>, vector<16x384xf32> -> vector<16x384xf32>
    %c0_12 = arith.constant 0 : index
    %c0_13 = arith.constant 0 : index
    %28 = vector.load %arg4[%c0_12, %c0_13] : memref<1x384xf32, #tpu.memory_space<vmem>>, vector<1x384xf32>
    %29 = vector.broadcast %28 : vector<1x384xf32> to vector<16x384xf32>
    %30 = arith.addf %27, %29 : vector<16x384xf32>
    %31 = vector.extract_strided_slice %30 {offsets = [0, 0], sizes = [16, 128], strides = [1, 1]} : vector<16x384xf32> to vector<16x128xf32>
    %32 = vector.extract_strided_slice %30 {offsets = [0, 128], sizes = [16, 128], strides = [1, 1]} : vector<16x384xf32> to vector<16x128xf32>
    %33 = vector.extract_strided_slice %30 {offsets = [0, 256], sizes = [16, 128], strides = [1, 1]} : vector<16x384xf32> to vector<16x128xf32>
    %34 = vector.shape_cast %31 : vector<16x128xf32> to vector<2x8x128xf32>
    %35 = vector.extract_strided_slice %34 {offsets = [0, 0, 0], sizes = [2, 1, 128], strides = [1, 1, 1]} : vector<2x8x128xf32> to vector<2x1x128xf32>
    %36 = vector.shape_cast %32 : vector<16x128xf32> to vector<2x8x128xf32>
    %37 = vector.broadcast %35 : vector<2x1x128xf32> to vector<2x8x128xf32>
    %38 = arith.mulf %37, %36 : vector<2x8x128xf32>
    %39 = vector.shape_cast %38 : vector<2x8x128xf32> to vector<16x128xf32>
    %40 = arith.truncf %39 : vector<16x128xf32> to vector<16x128xbf16>
    %c0_14 = arith.constant 0 : index
    %c0_15 = arith.constant 0 : index
    %41 = vector.load %arg5[%c0_14, %c0_15] : memref<128x4xbf16, #tpu.memory_space<vmem>>, vector<128x4xbf16>
    %cst_16 = arith.constant dense<0.000000e+00> : vector<16x4xf32>
    %42 = tpu.matmul %40, %41, %cst_16 {dimension_numbers = #tpu.dot_dimension_numbers<[1], [0], [0], [1], [0, 0, 1, 1], [], []>} : vector<16x128xbf16>, vector<128x4xbf16>, vector<16x4xf32> -> vector<16x4xf32>
    %cst_17 = arith.constant 0.176776692 : f32
    %43 = vector.broadcast %cst_17 : f32 to vector<16x4xf32>
    %44 = arith.mulf %42, %43 : vector<16x4xf32>
    %45 = vector.shape_cast %44 : vector<16x4xf32> to vector<2x8x4xf32>
    %cst_18 = arith.constant dense<0xFF800000> : vector<2x4xf32>
    %46 = vector.multi_reduction <maximumf>, %45, %cst_18 [1] : vector<2x8x4xf32> to vector<2x4xf32>
    %47 = vector.shape_cast %46 : vector<2x4xf32> to vector<2x1x4xf32>
    %48 = vector.broadcast %47 : vector<2x1x4xf32> to vector<2x8x4xf32>
    %49 = arith.subf %45, %48 : vector<2x8x4xf32>
    %50 = math.exp %49 : vector<2x8x4xf32>
    %cst_19 = arith.constant dense<0.000000e+00> : vector<2x4xf32>
    %51 = vector.multi_reduction <add>, %50, %cst_19 [1] : vector<2x8x4xf32> to vector<2x4xf32>
    %52 = vector.shape_cast %51 : vector<2x4xf32> to vector<2x1x4xf32>
    %53 = tpu.reciprocal %52 {approx = true} : vector<2x1x4xf32> -> vector<2x1x4xf32>
    %54 = vector.broadcast %53 : vector<2x1x4xf32> to vector<2x8x4xf32>
    %55 = arith.mulf %50, %54 : vector<2x8x4xf32>
    %56 = vector.shape_cast %55 : vector<2x8x4xf32> to vector<16x4xf32>
    %57 = arith.truncf %56 : vector<16x4xf32> to vector<16x4xbf16>
    %c0_20 = arith.constant 0 : index
    %c0_21 = arith.constant 0 : index
    %58 = vector.load %arg6[%c0_20, %c0_21] : memref<4x128xbf16, #tpu.memory_space<vmem>>, vector<4x128xbf16>
    %cst_22 = arith.constant dense<0.000000e+00> : vector<16x128xf32>
    %59 = tpu.matmul %57, %58, %cst_22 {dimension_numbers = #tpu.dot_dimension_numbers<[1], [0], [0], [1], [0, 0, 1, 1], [], []>} : vector<16x4xbf16>, vector<4x128xbf16>, vector<16x128xf32> -> vector<16x128xf32>
    %60 = arith.mulf %59, %33 : vector<16x128xf32>
    %61 = vector.shape_cast %60 : vector<16x128xf32> to vector<2x8x128xf32>
    %cst_23 = arith.constant dense<0.000000e+00> : vector<2x128xf32>
    %62 = vector.multi_reduction <add>, %61, %cst_23 [1] : vector<2x8x128xf32> to vector<2x128xf32>
    %63 = arith.truncf %62 : vector<2x128xf32> to vector<2x128xbf16>
    %c0_24 = arith.constant 0 : index
    %c0_25 = arith.constant 0 : index
    %64 = vector.load %arg7[%c0_24, %c0_25] : memref<128x128xbf16, #tpu.memory_space<vmem>>, vector<128x128xbf16>
    %cst_26 = arith.constant dense<0.000000e+00> : vector<2x128xf32>
    %65 = tpu.matmul %63, %64, %cst_26 {dimension_numbers = #tpu.dot_dimension_numbers<[1], [0], [0], [1], [0, 0, 1, 1], [], []>} : vector<2x128xbf16>, vector<128x128xbf16>, vector<2x128xf32> -> vector<2x128xf32>
    %c0_27 = arith.constant 0 : index
    %c0_28 = arith.constant 0 : index
    %66 = vector.load %arg8[%c0_27, %c0_28] : memref<1x128xf32, #tpu.memory_space<vmem>>, vector<1x128xf32>
    %67 = vector.broadcast %66 : vector<1x128xf32> to vector<2x128xf32>
    %68 = arith.addf %65, %67 : vector<2x128xf32>
    %69 = vector.shape_cast %24 : vector<16x128xf32> to vector<2x8x128xf32>
    %70 = vector.extract_strided_slice %69 {offsets = [0, 0, 0], sizes = [2, 1, 128], strides = [1, 1, 1]} : vector<2x8x128xf32> to vector<2x1x128xf32>
    %71 = vector.shape_cast %70 : vector<2x1x128xf32> to vector<2x128xf32>
    %72 = arith.addf %71, %68 : vector<2x128xf32>
    %c0_29 = arith.constant 0 : index
    %c0_30 = arith.constant 0 : index
    %73 = vector.load %arg9[%c0_29, %c0_30] : memref<1x128xf32, #tpu.memory_space<vmem>>, vector<1x128xf32>
    %c0_31 = arith.constant 0 : index
    %c0_32 = arith.constant 0 : index
    %74 = vector.load %arg10[%c0_31, %c0_32] : memref<1x128xf32, #tpu.memory_space<vmem>>, vector<1x128xf32>
    %cst_33 = arith.constant dense<0.000000e+00> : vector<2xf32>
    %75 = vector.multi_reduction <add>, %72, %cst_33 [1] : vector<2x128xf32> to vector<2xf32>
    %76 = vector.shape_cast %75 : vector<2xf32> to vector<2x1xf32>
    %cst_34 = arith.constant 1.280000e+02 : f32
    %77 = vector.broadcast %cst_34 : f32 to vector<2x1xf32>
    %78 = arith.divf %76, %77 : vector<2x1xf32>
    %79 = vector.broadcast %78 : vector<2x1xf32> to vector<2x128xf32>
    %80 = arith.subf %72, %79 : vector<2x128xf32>
    %81 = arith.mulf %80, %80 : vector<2x128xf32>
    %cst_35 = arith.constant dense<0.000000e+00> : vector<2xf32>
    %82 = vector.multi_reduction <add>, %81, %cst_35 [1] : vector<2x128xf32> to vector<2xf32>
    %83 = vector.shape_cast %82 : vector<2xf32> to vector<2x1xf32>
    %cst_36 = arith.constant 1.280000e+02 : f32
    %84 = vector.broadcast %cst_36 : f32 to vector<2x1xf32>
    %85 = arith.divf %83, %84 : vector<2x1xf32>
    %86 = vector.broadcast %78 : vector<2x1xf32> to vector<2x128xf32>
    %87 = arith.subf %72, %86 : vector<2x128xf32>
    %cst_37 = arith.constant 9.99999996E-13 : f32
    %88 = vector.broadcast %cst_37 : f32 to vector<2x1xf32>
    %89 = arith.addf %85, %88 : vector<2x1xf32>
    %90 = math.rsqrt %89 : vector<2x1xf32>
    %91 = vector.broadcast %90 : vector<2x1xf32> to vector<2x128xf32>
    %92 = arith.mulf %87, %91 : vector<2x128xf32>
    %93 = vector.broadcast %73 : vector<1x128xf32> to vector<2x128xf32>
    %94 = arith.mulf %92, %93 : vector<2x128xf32>
    %95 = vector.broadcast %74 : vector<1x128xf32> to vector<2x128xf32>
    %96 = arith.addf %94, %95 : vector<2x128xf32>
    %97 = arith.truncf %96 : vector<2x128xf32> to vector<2x128xbf16>
    %c0_38 = arith.constant 0 : index
    %c0_39 = arith.constant 0 : index
    %98 = vector.load %arg11[%c0_38, %c0_39] : memref<128x256xbf16, #tpu.memory_space<vmem>>, vector<128x256xbf16>
    %cst_40 = arith.constant dense<0.000000e+00> : vector<2x256xf32>
    %99 = tpu.matmul %97, %98, %cst_40 {dimension_numbers = #tpu.dot_dimension_numbers<[1], [0], [0], [1], [0, 0, 1, 1], [], []>} : vector<2x128xbf16>, vector<128x256xbf16>, vector<2x256xf32> -> vector<2x256xf32>
    %c0_41 = arith.constant 0 : index
    %c0_42 = arith.constant 0 : index
    %100 = vector.load %arg12[%c0_41, %c0_42] : memref<1x256xf32, #tpu.memory_space<vmem>>, vector<1x256xf32>
    %101 = vector.broadcast %100 : vector<1x256xf32> to vector<2x256xf32>
    %102 = arith.addf %99, %101 : vector<2x256xf32>
    %103 = arith.mulf %102, %102 : vector<2x256xf32>
    %104 = arith.mulf %102, %103 : vector<2x256xf32>
    %cst_43 = arith.constant 4.471500e-02 : f32
    %105 = vector.broadcast %cst_43 : f32 to vector<2x256xf32>
    %106 = arith.mulf %105, %104 : vector<2x256xf32>
    %107 = arith.addf %102, %106 : vector<2x256xf32>
    %cst_44 = arith.constant 0.797884583 : f32
    %108 = vector.broadcast %cst_44 : f32 to vector<2x256xf32>
    %109 = arith.mulf %108, %107 : vector<2x256xf32>
    %110 = math.tanh %109 : vector<2x256xf32>
    %cst_45 = arith.constant 1.000000e+00 : f32
    %111 = vector.broadcast %cst_45 : f32 to vector<2x256xf32>
    %112 = arith.addf %111, %110 : vector<2x256xf32>
    %cst_46 = arith.constant 5.000000e-01 : f32
    %113 = vector.broadcast %cst_46 : f32 to vector<2x256xf32>
    %114 = arith.mulf %113, %112 : vector<2x256xf32>
    %115 = arith.mulf %102, %114 : vector<2x256xf32>
    %116 = arith.truncf %115 : vector<2x256xf32> to vector<2x256xbf16>
    %c0_47 = arith.constant 0 : index
    %c0_48 = arith.constant 0 : index
    %117 = vector.load %arg13[%c0_47, %c0_48] : memref<256x128xbf16, #tpu.memory_space<vmem>>, vector<256x128xbf16>
    %cst_49 = arith.constant dense<0.000000e+00> : vector<2x128xf32>
    %118 = tpu.matmul %116, %117, %cst_49 {dimension_numbers = #tpu.dot_dimension_numbers<[1], [0], [0], [1], [0, 0, 1, 1], [], []>} : vector<2x256xbf16>, vector<256x128xbf16>, vector<2x128xf32> -> vector<2x128xf32>
    %c0_50 = arith.constant 0 : index
    %c0_51 = arith.constant 0 : index
    %119 = vector.load %arg14[%c0_50, %c0_51] : memref<1x128xf32, #tpu.memory_space<vmem>>, vector<1x128xf32>
    %120 = vector.broadcast %119 : vector<1x128xf32> to vector<2x128xf32>
    %121 = arith.addf %118, %120 : vector<2x128xf32>
    %122 = arith.addf %96, %121 : vector<2x128xf32>
    %c0_52 = arith.constant 0 : index
    %c0_53 = arith.constant 0 : index
    %123 = vector.load %arg15[%c0_52, %c0_53] : memref<1x128xf32, #tpu.memory_space<vmem>>, vector<1x128xf32>
    %c0_54 = arith.constant 0 : index
    %c0_55 = arith.constant 0 : index
    %124 = vector.load %arg16[%c0_54, %c0_55] : memref<1x128xf32, #tpu.memory_space<vmem>>, vector<1x128xf32>
    %cst_56 = arith.constant dense<0.000000e+00> : vector<2xf32>
    %125 = vector.multi_reduction <add>, %122, %cst_56 [1] : vector<2x128xf32> to vector<2xf32>
    %126 = vector.shape_cast %125 : vector<2xf32> to vector<2x1xf32>
    %cst_57 = arith.constant 1.280000e+02 : f32
    %127 = vector.broadcast %cst_57 : f32 to vector<2x1xf32>
    %128 = arith.divf %126, %127 : vector<2x1xf32>
    %129 = vector.broadcast %128 : vector<2x1xf32> to vector<2x128xf32>
    %130 = arith.subf %122, %129 : vector<2x128xf32>
    %131 = arith.mulf %130, %130 : vector<2x128xf32>
    %cst_58 = arith.constant dense<0.000000e+00> : vector<2xf32>
    %132 = vector.multi_reduction <add>, %131, %cst_58 [1] : vector<2x128xf32> to vector<2xf32>
    %133 = vector.shape_cast %132 : vector<2xf32> to vector<2x1xf32>
    %cst_59 = arith.constant 1.280000e+02 : f32
    %134 = vector.broadcast %cst_59 : f32 to vector<2x1xf32>
    %135 = arith.divf %133, %134 : vector<2x1xf32>
    %136 = vector.broadcast %128 : vector<2x1xf32> to vector<2x128xf32>
    %137 = arith.subf %122, %136 : vector<2x128xf32>
    %cst_60 = arith.constant 9.99999996E-13 : f32
    %138 = vector.broadcast %cst_60 : f32 to vector<2x1xf32>
    %139 = arith.addf %135, %138 : vector<2x1xf32>
    %140 = math.rsqrt %139 : vector<2x1xf32>
    %141 = vector.broadcast %140 : vector<2x1xf32> to vector<2x128xf32>
    %142 = arith.mulf %137, %141 : vector<2x128xf32>
    %143 = vector.broadcast %123 : vector<1x128xf32> to vector<2x128xf32>
    %144 = arith.mulf %142, %143 : vector<2x128xf32>
    %145 = vector.broadcast %124 : vector<1x128xf32> to vector<2x128xf32>
    %146 = arith.addf %144, %145 : vector<2x128xf32>
    %c0_61 = arith.constant 0 : index
    %c0_62 = arith.constant 0 : index
    %147 = vector.load %arg17[%c0_61, %c0_62] : memref<2x128xf32, #tpu.memory_space<vmem>>, vector<2x128xf32>
    tpu.vector_store %arg17[%c0_61, %c0_62], %146 {strides = array<i32>} : memref<2x128xf32, #tpu.memory_space<vmem>>, vector<2x128xf32>,
    return
  }
}

</mosaic_0001>

<llo_original>
// kernel: language_embedding_forward.1
$region0: #{language_embedding_forward.1}
  #allocation0 [shape = 'u32[]', space=smem, size = 0x4, offset = 0x4, fixed_abs, tag = 'smem constant byte address 0x4 - core index']
  #allocation1 [shape = 'u32[144,128]{1,0:T(1,128)}', space=vmem, size = 0x12000, scoped, tag = 'internal scratch']
  %s0 = inlined_call_operand.vmem [shape: f32[16,128], index: 0, kind: input, shape index: {}]
  %s1 = inlined_call_operand.vmem [shape: f32[1,128], index: 1, kind: input, shape index: {}]
  %s2 = inlined_call_operand.vmem [shape: f32[1,128], index: 2, kind: input, shape index: {}]
  %s3 = inlined_call_operand.vmem [shape: bf16[128,384], index: 3, kind: input, shape index: {}]
  %s4 = inlined_call_operand.vmem [shape: f32[1,384], index: 4, kind: input, shape index: {}]
  %s5 = inlined_call_operand.vmem [shape: bf16[128,4], index: 5, kind: input, shape index: {}]
  %s6 = inlined_call_operand.vmem [shape: bf16[4,128], index: 6, kind: input, shape index: {}]
  %s7 = inlined_call_operand.vmem [shape: bf16[128,128], index: 7, kind: input, shape index: {}]
  %s8 = inlined_call_operand.vmem [shape: f32[1,128], index: 8, kind: input, shape index: {}]
  %s9 = inlined_call_operand.vmem [shape: f32[1,128], index: 9, kind: input, shape index: {}]
  %s10 = inlined_call_operand.vmem [shape: f32[1,128], index: 10, kind: input, shape index: {}]
  %s11 = inlined_call_operand.vmem [shape: bf16[128,256], index: 11, kind: input, shape index: {}]
  %s12 = inlined_call_operand.vmem [shape: f32[1,256], index: 12, kind: input, shape index: {}]
  %s13 = inlined_call_operand.vmem [shape: bf16[256,128], index: 13, kind: input, shape index: {}]
  %s14 = inlined_call_operand.vmem [shape: f32[1,128], index: 14, kind: input, shape index: {}]
  %s15 = inlined_call_operand.vmem [shape: f32[1,128], index: 15, kind: input, shape index: {}]
  %s16 = inlined_call_operand.vmem [shape: f32[1,128], index: 16, kind: input, shape index: {}]
  %s17 = inlined_call_operand.hbm [shape: f32[2,128], index: 17, kind: output, shape index: {}]
  %s18 = sld [smem:[#allocation0]]
  $region78: #{language_embedding_forward.1} parent=0
    _
  %s20 = ssub.s32 1, %s18
  %s21 = scalar_select 0, %s20, %s18
  $region1: #{language_embedding_forward.1} parent=0
    #allocation2 [shape = 'u8[1024]{0}', space=vmem, size = 0x400, scoped, tag = 'output window, operand 0, single buffered']
    #allocation3 [shape = 's32[1]{0}', space=sflag, size = 0x4, scoped, tag = 'scoped memory for language_embedding_forward.1']
    %22 = vsyncpa [#allocation3], 0
    // Predicated region
    $region2: #{language_embedding_forward.1} parent=1 // pred_check
      _
    $region3: #{language_embedding_forward.1} parent=1 // pred_check_branch
      %24 = sbr.rel (0) target = $region5
    $region4: #{language_embedding_forward.1} parent=1 // pred_region
      _
    $region5: #{language_embedding_forward.1} parent=1 // pred_fallthru
      _
    // Predicated region
    $region6: #{language_embedding_forward.1} parent=1 // pred_check
      _
    $region7: #{language_embedding_forward.1} parent=1 // pred_check_branch
      %26 = sbr.rel (0) target = $region9
    $region8: #{language_embedding_forward.1} parent=1 // pred_region
      _
    $region9: #{language_embedding_forward.1} parent=1 // pred_fallthru
      _
    // Predicated region
    $region10: #{language_embedding_forward.1} parent=1 // pred_check
      _
    $region11: #{language_embedding_forward.1} parent=1 // pred_check_branch
      %28 = sbr.rel (0) target = $region13
    $region12: #{language_embedding_forward.1} parent=1 // pred_region
      _
    $region13: #{language_embedding_forward.1} parent=1 // pred_fallthru
      _
    // Predicated region
    $region14: #{language_embedding_forward.1} parent=1 // pred_check
      _
    $region15: #{language_embedding_forward.1} parent=1 // pred_check_branch
      %30 = sbr.rel (0) target = $region17
    $region16: #{language_embedding_forward.1} parent=1 // pred_region
      _
    $region17: #{language_embedding_forward.1} parent=1 // pred_fallthru
      _
    // Predicated region
    $region18: #{language_embedding_forward.1} parent=1 // pred_check
      _
    $region19: #{language_embedding_forward.1} parent=1 // pred_check_branch
      %32 = sbr.rel (0) target = $region21
    $region20: #{language_embedding_forward.1} parent=1 // pred_region
      _
    $region21: #{language_embedding_forward.1} parent=1 // pred_fallthru
      _
    // Predicated region
    $region22: #{language_embedding_forward.1} parent=1 // pred_check
      _
    $region23: #{language_embedding_forward.1} parent=1 // pred_check_branch
      %34 = sbr.rel (0) target = $region25
    $region24: #{language_embedding_forward.1} parent=1 // pred_region
      _
    $region25: #{language_embedding_forward.1} parent=1 // pred_fallthru
      _
    // Predicated region
    $region26: #{language_embedding_forward.1} parent=1 // pred_check
      _
    $region27: #{language_embedding_forward.1} parent=1 // pred_check_branch
      %36 = sbr.rel (0) target = $region29
    $region28: #{language_embedding_forward.1} parent=1 // pred_region
      _
    $region29: #{language_embedding_forward.1} parent=1 // pred_fallthru
      _
    // Predicated region
    $region30: #{language_embedding_forward.1} parent=1 // pred_check
      _
    $region31: #{language_embedding_forward.1} parent=1 // pred_check_branch
      %38 = sbr.rel (0) target = $region33
    $region32: #{language_embedding_forward.1} parent=1 // pred_region
      _
    $region33: #{language_embedding_forward.1} parent=1 // pred_fallthru
      _
    // Predicated region
    $region34: #{language_embedding_forward.1} parent=1 // pred_check
      _
    $region35: #{language_embedding_forward.1} parent=1 // pred_check_branch
      %40 = sbr.rel (0) target = $region37
    $region36: #{language_embedding_forward.1} parent=1 // pred_region
      _
    $region37: #{language_embedding_forward.1} parent=1 // pred_fallthru
      _
    // Predicated region
    $region38: #{language_embedding_forward.1} parent=1 // pred_check
      _
    $region39: #{language_embedding_forward.1} parent=1 // pred_check_branch
      %42 = sbr.rel (0) target = $region41
    $region40: #{language_embedding_forward.1} parent=1 // pred_region
      _
    $region41: #{language_embedding_forward.1} parent=1 // pred_fallthru
      _
    // Predicated region
    $region42: #{language_embedding_forward.1} parent=1 // pred_check
      _
    $region43: #{language_embedding_forward.1} parent=1 // pred_check_branch
      %44 = sbr.rel (0) target = $region45
    $region44: #{language_embedding_forward.1} parent=1 // pred_region
      _
    $region45: #{language_embedding_forward.1} parent=1 // pred_fallthru
      _
    // Predicated region
    $region46: #{language_embedding_forward.1} parent=1 // pred_check
      _
    $region47: #{language_embedding_forward.1} parent=1 // pred_check_branch
      %46 = sbr.rel (0) target = $region49
    $region48: #{language_embedding_forward.1} parent=1 // pred_region
      _
    $region49: #{language_embedding_forward.1} parent=1 // pred_fallthru
      _
    // Predicated region
    $region50: #{language_embedding_forward.1} parent=1 // pred_check
      _
    $region51: #{language_embedding_forward.1} parent=1 // pred_check_branch
      %48 = sbr.rel (0) target = $region53
    $region52: #{language_embedding_forward.1} parent=1 // pred_region
      _
    $region53: #{language_embedding_forward.1} parent=1 // pred_fallthru
      _
    // Predicated region
    $region54: #{language_embedding_forward.1} parent=1 // pred_check
      _
    $region55: #{language_embedding_forward.1} parent=1 // pred_check_branch
      %50 = sbr.rel (0) target = $region57
    $region56: #{language_embedding_forward.1} parent=1 // pred_region
      _
    $region57: #{language_embedding_forward.1} parent=1 // pred_fallthru
      _
    // Predicated region
    $region58: #{language_embedding_forward.1} parent=1 // pred_check
      _
    $region59: #{language_embedding_forward.1} parent=1 // pred_check_branch
      %52 = sbr.rel (0) target = $region61
    $region60: #{language_embedding_forward.1} parent=1 // pred_region
      _
    $region61: #{language_embedding_forward.1} parent=1 // pred_fallthru
      _
    // Predicated region
    $region62: #{language_embedding_forward.1} parent=1 // pred_check
      _
    $region63: #{language_embedding_forward.1} parent=1 // pred_check_branch
      %54 = sbr.rel (0) target = $region65
    $region64: #{language_embedding_forward.1} parent=1 // pred_region
      _
    $region65: #{language_embedding_forward.1} parent=1 // pred_fallthru
      _
    // Predicated region
    $region66: #{language_embedding_forward.1} parent=1 // pred_check
      _
    $region67: #{language_embedding_forward.1} parent=1 // pred_check_branch
      %56 = sbr.rel (0) target = $region69
    $region68: #{language_embedding_forward.1} parent=1 // pred_region
      _
    $region69: #{language_embedding_forward.1} parent=1 // pred_fallthru
      _
    %v58 = vld [vmem:[%s0] sm:$0xff]
    %v59 = vld [vmem:[%s0 + $0x8] sm:$0xff]
    %v60 = vld [vmem:[%s1] sm:$0x1]
    %v61 = vld [vmem:[%s2] sm:$0x1]
    %62 = vadd.xlane.f32.xlu0 %v58
    %v63 = vpop.xlane.xlu0 %62
    %64 = vadd.xlane.f32.xlu0 %v59
    %v65 = vpop.xlane.xlu0 %64
    %v66 = vrcp.pop 128.0
    %v67 = vmul.f32 %v63, %v66
    %v68 = vmul.f32 %v65, %v66
    %v69 = vsub.f32 %v58, %v67
    %v70 = vsub.f32 %v59, %v68
    %v71 = vmul.f32 %v69, %v69
    %v72 = vmul.f32 %v70, %v70
    %73 = vadd.xlane.f32.xlu0 %v71
    %v74 = vpop.xlane.xlu0 %73
    %75 = vadd.xlane.f32.xlu0 %v72
    %v76 = vpop.xlane.xlu0 %75
    %v77 = vmul.f32 %v74, %v66
    %v78 = vmul.f32 %v76, %v66
    %v79 = vadd.f32 %v77, 1e-12
    %v80 = vadd.f32 %v78, 1e-12
    %v81 = vrsqrt.pop %v79
    %v82 = vrsqrt.pop %v80
    %v83 = vmul.f32 %v69, %v81
    %v84 = vmul.f32 %v70, %v82
    %v86 = vlaneseq
    %v87 = vshrl.u32 %v86, 7
    %v88 = vsub.s32 0, %v87
    %v89 = vrot.slane %v60, %v88
    %v91 = vmul.f32 %v83, %v89
    %v92 = vmul.f32 %v84, %v89
    %v94 = vlaneseq
    %v95 = vshrl.u32 %v94, 7
    %v96 = vsub.s32 0, %v95
    %v97 = vrot.slane %v61, %v96
    %v99 = vadd.f32 %v91, %v97
    %v100 = vadd.f32 %v92, %v97
    %v101 = vpack.c.bf16 %v100, %v99
    %v102 = vld [vmem:[%s3] sm:$0xff]
    %v103 = vld [vmem:[%s3 + $0x8] sm:$0xf]
    %v104 = vld [vmem:[%s3 + $0xc] sm:$0xff]
    %v105 = vld [vmem:[%s3 + $0x14] sm:$0xf]
    %v106 = vld [vmem:[%s3 + $0x18] sm:$0xff]
    %v107 = vld [vmem:[%s3 + $0x20] sm:$0xf]
    %v108 = vld [vmem:[%s3 + $0x24] sm:$0xff]
    %v109 = vld [vmem:[%s3 + $0x2c] sm:$0xf]
    %v110 = vld [vmem:[%s3 + $0x30] sm:$0xff]
    %v111 = vld [vmem:[%s3 + $0x38] sm:$0xf]
    %v112 = vld [vmem:[%s3 + $0x3c] sm:$0xff]
    %v113 = vld [vmem:[%s3 + $0x44] sm:$0xf]
    %v114 = vld [vmem:[%s3 + $0x48] sm:$0xff]
    %v115 = vld [vmem:[%s3 + $0x50] sm:$0xf]
    %v116 = vld [vmem:[%s3 + $0x54] sm:$0xff]
    %v117 = vld [vmem:[%s3 + $0x5c] sm:$0xf]
    %v118 = vld [vmem:[%s3 + $0x60] sm:$0xff]
    %v119 = vld [vmem:[%s3 + $0x68] sm:$0xf]
    %v120 = vld [vmem:[%s3 + $0x6c] sm:$0xff]
    %v121 = vld [vmem:[%s3 + $0x74] sm:$0xf]
    %v122 = vld [vmem:[%s3 + $0x78] sm:$0xff]
    %v123 = vld [vmem:[%s3 + $0x80] sm:$0xf]
    %v124 = vld [vmem:[%s3 + $0x84] sm:$0xff]
    %v125 = vld [vmem:[%s3 + $0x8c] sm:$0xf]
    %v126 = vld [vmem:[%s3 + $0x90] sm:$0xff]
    %v127 = vld [vmem:[%s3 + $0x98] sm:$0xf]
    %v128 = vld [vmem:[%s3 + $0x9c] sm:$0xff]
    %v129 = vld [vmem:[%s3 + $0xa4] sm:$0xf]
    %v130 = vld [vmem:[%s3 + $0xa8] sm:$0xff]
    %v131 = vld [vmem:[%s3 + $0xb0] sm:$0xf]
    %v132 = vld [vmem:[%s3 + $0xb4] sm:$0xff]
    %v133 = vld [vmem:[%s3 + $0xbc] sm:$0xf]
    %v134 = vld [vmem:[%s4] sm:$0x7]
    %v136 = vlaneseq
    %v137 = vshrl.u32 %v136, 7
    %v138 = vsub.s32 0, %v137
    %v139 = vrot.slane %v134, %v138
    %v140 = vlaneseq
    %v141 = vshrl.u32 %v140, 7
    %v142 = vsub.s32 1, %v141
    %v143 = vrot.slane %v134, %v142
    %v144 = vlaneseq
    %v145 = vshrl.u32 %v144, 7
    %v146 = vsub.s32 2, %v145
    %v147 = vrot.slane %v134, %v146
    %v183 = vunpack.c.l.b16 %v102
    %v184 = vunpack.c.h.b16 %v102
    %v185 = vunpack.c.l.b16 %v103
    %v186 = vunpack.c.l.b16 %v104
    %v187 = vunpack.c.h.b16 %v104
    %v188 = vunpack.c.l.b16 %v105
    %v189 = vunpack.c.l.b16 %v106
    %v190 = vunpack.c.h.b16 %v106
    %v191 = vunpack.c.l.b16 %v107
    %v192 = vunpack.c.l.b16 %v108
    %v193 = vunpack.c.h.b16 %v108
    %v194 = vunpack.c.l.b16 %v109
    %v195 = vunpack.c.l.b16 %v110
    %v196 = vunpack.c.h.b16 %v110
    %v197 = vunpack.c.l.b16 %v111
    %v198 = vunpack.c.l.b16 %v112
    %v199 = vunpack.c.h.b16 %v112
    %v200 = vunpack.c.l.b16 %v113
    %v201 = vunpack.c.l.b16 %v114
    %v202 = vunpack.c.h.b16 %v114
    %v203 = vunpack.c.l.b16 %v115
    %v204 = vunpack.c.l.b16 %v116
    %v205 = vunpack.c.h.b16 %v116
    %v206 = vunpack.c.l.b16 %v117
    %v207 = vunpack.c.l.b16 %v118
    %v208 = vunpack.c.h.b16 %v118
    %v209 = vunpack.c.l.b16 %v119
    %v210 = vunpack.c.l.b16 %v120
    %v211 = vunpack.c.h.b16 %v120
    %v212 = vunpack.c.l.b16 %v121
    %v213 = vunpack.c.l.b16 %v122
    %v214 = vunpack.c.h.b16 %v122
    %v215 = vunpack.c.l.b16 %v123
    %v216 = vunpack.c.l.b16 %v124
    %v217 = vunpack.c.h.b16 %v124
    %v218 = vunpack.c.l.b16 %v125
    %v219 = vunpack.c.l.b16 %v126
    %v220 = vunpack.c.h.b16 %v126
    %v221 = vunpack.c.l.b16 %v127
    %v222 = vunpack.c.l.b16 %v128
    %v223 = vunpack.c.h.b16 %v128
    %v224 = vunpack.c.l.b16 %v129
    %v225 = vunpack.c.l.b16 %v130
    %v226 = vunpack.c.h.b16 %v130
    %v227 = vunpack.c.l.b16 %v131
    %v228 = vunpack.c.l.b16 %v132
    %v229 = vunpack.c.h.b16 %v132
    %v230 = vunpack.c.l.b16 %v133
    %v231 = vpack.c.b16 %v186, %v183
    %v232 = vpack.c.b16 %v187, %v184
    %v233 = vpack.c.b16 %v188, %v185
    %v234 = vpack.c.b16 %v192, %v189
    %v235 = vpack.c.b16 %v193, %v190
    %v236 = vpack.c.b16 %v194, %v191
    %v237 = vpack.c.b16 %v198, %v195
    %v238 = vpack.c.b16 %v199, %v196
    %v239 = vpack.c.b16 %v200, %v197
    %v240 = vpack.c.b16 %v204, %v201
    %v241 = vpack.c.b16 %v205, %v202
    %v242 = vpack.c.b16 %v206, %v203
    %v243 = vpack.c.b16 %v210, %v207
    %v244 = vpack.c.b16 %v211, %v208
    %v245 = vpack.c.b16 %v212, %v209
    %v246 = vpack.c.b16 %v216, %v213
    %v247 = vpack.c.b16 %v217, %v214
    %v248 = vpack.c.b16 %v218, %v215
    %v249 = vpack.c.b16 %v222, %v219
    %v250 = vpack.c.b16 %v223, %v220
    %v251 = vpack.c.b16 %v224, %v221
    %v252 = vpack.c.b16 %v228, %v225
    %v253 = vpack.c.b16 %v229, %v226
    %v254 = vpack.c.b16 %v230, %v227
    %279 = vmatprep.subr.bf16.mxu0 %v232
    %280 = vmatpush1.bf16.msra.mxu0 %v231
    %281 = vmatprep.subr.bf16.mxu0 %v235
    %282 = vmatpush1.bf16.msra.mxu0 %v234
    %283 = vmatprep.subr.bf16.mxu0 %v238
    %284 = vmatpush1.bf16.msra.mxu0 %v237
    %285 = vmatprep.subr.bf16.mxu0 %v241
    %286 = vmatpush1.bf16.msra.mxu0 %v240
    %287 = vmatprep.subr.bf16.mxu0 %v244
    %288 = vmatpush1.bf16.msra.mxu0 %v243
    %289 = vmatprep.subr.bf16.mxu0 %v247
    %290 = vmatpush1.bf16.msra.mxu0 %v246
    %291 = vmatprep.subr.bf16.mxu0 %v250
    %292 = vmatpush1.bf16.msra.mxu0 %v249
    %293 = vmatprep.subr.bf16.mxu0 %v253
    %294 = vmatpush1.bf16.msra.mxu0 %v252
    %295 = vmatprep.subr.bf16.mxu0 0
    %296 = vmatpush1.bf16.msra.mxu0 0
    %297 = vmatprep.subr.bf16.mxu0 0
    %298 = vmatpush1.bf16.msra.mxu0 0
    %299 = vmatprep.subr.bf16.mxu0 0
    %300 = vmatpush1.bf16.msra.mxu0 0
    %301 = vmatprep.subr.bf16.mxu0 0
    %302 = vmatpush1.bf16.msra.mxu0 0
    %303 = vmatprep.subr.bf16.mxu0 0
    %304 = vmatpush1.bf16.msra.mxu0 0
    %305 = vmatprep.subr.bf16.mxu0 0
    %306 = vmatpush1.bf16.msra.mxu0 0
    %307 = vmatprep.subr.bf16.mxu0 0
    %308 = vmatpush1.bf16.msra.mxu0 0
    %309 = vmatprep.subr.bf16.mxu0 0
    %310 = vmatpush1.bf16.msra.mxu0 0
    %311 = vmatprep.mubr.bf16.mxu0 0
    %312 = vmatmul.mubr.bf16.gmra.mrb[0].mxu0 %v101
    %v313 = vpop.f32.mrb[0].mxu0
    %v314 = vadd.f32 %v139, %v313
    %v315 = vpop.f32.mrb[0].mxu0
    %v316 = vadd.f32 %v143, %v315
    %v317 = vpop.f32.mrb[0].mxu0
    %v318 = vadd.f32 %v139, %v317
    %v319 = vpop.f32.mrb[0].mxu0
    %v320 = vadd.f32 %v143, %v319
    %321 = vdwg.mxu0
    %322 = vmatprep.subr.bf16.mxu0 0
    %323 = vmatpush1.bf16.msra.mxu0 %v233
    %324 = vmatprep.subr.bf16.mxu0 0
    %325 = vmatpush1.bf16.msra.mxu0 %v236
    %326 = vmatprep.subr.bf16.mxu0 0
    %327 = vmatpush1.bf16.msra.mxu0 %v239
    %328 = vmatprep.subr.bf16.mxu0 0
    %329 = vmatpush1.bf16.msra.mxu0 %v242
    %330 = vmatprep.subr.bf16.mxu0 0
    %331 = vmatpush1.bf16.msra.mxu0 %v245
    %332 = vmatprep.subr.bf16.mxu0 0
    %333 = vmatpush1.bf16.msra.mxu0 %v248
    %334 = vmatprep.subr.bf16.mxu0 0
    %335 = vmatpush1.bf16.msra.mxu0 %v251
    %336 = vmatprep.subr.bf16.mxu0 0
    %337 = vmatpush1.bf16.msra.mxu0 %v254
    %338 = vmatprep.subr.bf16.mxu0 0
    %339 = vmatpush1.bf16.msra.mxu0 0
    %340 = vmatprep.subr.bf16.mxu0 0
    %341 = vmatpush1.bf16.msra.mxu0 0
    %342 = vmatprep.subr.bf16.mxu0 0
    %343 = vmatpush1.bf16.msra.mxu0 0
    %344 = vmatprep.subr.bf16.mxu0 0
    %345 = vmatpush1.bf16.msra.mxu0 0
    %346 = vmatprep.subr.bf16.mxu0 0
    %347 = vmatpush1.bf16.msra.mxu0 0
    %348 = vmatprep.subr.bf16.mxu0 0
    %349 = vmatpush1.bf16.msra.mxu0 0
    %350 = vmatprep.subr.bf16.mxu0 0
    %351 = vmatpush1.bf16.msra.mxu0 0
    %352 = vmatprep.subr.bf16.mxu0 0
    %353 = vmatpush1.bf16.msra.mxu0 0
    %354 = vmatprep.mubr.bf16.mxu0 0
    %355 = vmatmul.mubr.bf16.gmra.mrb[0].mxu0 %v101
    %v356 = vpop.f32.mrb[0].mxu0
    %v357 = vadd.f32 %v147, %v356
    %v358 = vpop.f32.mrb[0].mxu0
    %v359 = vpop.f32.mrb[0].mxu0
    %v360 = vadd.f32 %v147, %v359
    %v361 = vpop.f32.mrb[0].mxu0
    %362 = vdwg.mxu0
    %v363 = vlaneseq
    %v364 = vshrl.u32 %v363, 7
    %v365 = vsub.s32 0, %v364
    %v366 = vrot.slane %v314, %v365
    %v367 = vlaneseq
    %v368 = vshrl.u32 %v367, 7
    %v369 = vsub.s32 0, %v368
    %v370 = vrot.slane %v318, %v369
    %v371 = vmul.f32 %v366, %v316
    %v372 = vmul.f32 %v370, %v320
    %v373 = vpack.c.bf16 %v372, %v371
    %v374 = vld [vmem:[%s5] sm:$0xf]
    %v375 = vld [vmem:[%s5 + $0x4] sm:$0xf]
    %v376 = vld [vmem:[%s5 + $0x8] sm:$0xf]
    %v377 = vld [vmem:[%s5 + $0xc] sm:$0xf]
    %v378 = vld [vmem:[%s5 + $0x10] sm:$0xf]
    %v379 = vld [vmem:[%s5 + $0x14] sm:$0xf]
    %v380 = vld [vmem:[%s5 + $0x18] sm:$0xf]
    %v381 = vld [vmem:[%s5 + $0x1c] sm:$0xf]
    %v382 = vld [vmem:[%s5 + $0x20] sm:$0xf]
    %v383 = vld [vmem:[%s5 + $0x24] sm:$0xf]
    %v384 = vld [vmem:[%s5 + $0x28] sm:$0xf]
    %v385 = vld [vmem:[%s5 + $0x2c] sm:$0xf]
    %v386 = vld [vmem:[%s5 + $0x30] sm:$0xf]
    %v387 = vld [vmem:[%s5 + $0x34] sm:$0xf]
    %v388 = vld [vmem:[%s5 + $0x38] sm:$0xf]
    %v389 = vld [vmem:[%s5 + $0x3c] sm:$0xf]
    %v406 = vunpack.c.l.b16 %v374
    %v407 = vunpack.c.l.b16 %v375
    %v408 = vunpack.c.l.b16 %v376
    %v409 = vunpack.c.l.b16 %v377
    %v410 = vunpack.c.l.b16 %v378
    %v411 = vunpack.c.l.b16 %v379
    %v412 = vunpack.c.l.b16 %v380
    %v413 = vunpack.c.l.b16 %v381
    %v414 = vunpack.c.l.b16 %v382
    %v415 = vunpack.c.l.b16 %v383
    %v416 = vunpack.c.l.b16 %v384
    %v417 = vunpack.c.l.b16 %v385
    %v418 = vunpack.c.l.b16 %v386
    %v419 = vunpack.c.l.b16 %v387
    %v420 = vunpack.c.l.b16 %v388
    %v421 = vunpack.c.l.b16 %v389
    %v422 = vpack.c.b16 %v407, %v406
    %v423 = vpack.c.b16 %v409, %v408
    %v424 = vpack.c.b16 %v411, %v410
    %v425 = vpack.c.b16 %v413, %v412
    %v426 = vpack.c.b16 %v415, %v414
    %v427 = vpack.c.b16 %v417, %v416
    %v428 = vpack.c.b16 %v419, %v418
    %v429 = vpack.c.b16 %v421, %v420
    %438 = vmatprep.subr.bf16.mxu0 0
    %439 = vmatpush1.bf16.msra.mxu0 %v422
    %440 = vmatprep.subr.bf16.mxu0 0
    %441 = vmatpush1.bf16.msra.mxu0 %v423
    %442 = vmatprep.subr.bf16.mxu0 0
    %443 = vmatpush1.bf16.msra.mxu0 %v424
    %444 = vmatprep.subr.bf16.mxu0 0
    %445 = vmatpush1.bf16.msra.mxu0 %v425
    %446 = vmatprep.subr.bf16.mxu0 0
    %447 = vmatpush1.bf16.msra.mxu0 %v426
    %448 = vmatprep.subr.bf16.mxu0 0
    %449 = vmatpush1.bf16.msra.mxu0 %v427
    %450 = vmatprep.subr.bf16.mxu0 0
    %451 = vmatpush1.bf16.msra.mxu0 %v428
    %452 = vmatprep.subr.bf16.mxu0 0
    %453 = vmatpush1.bf16.msra.mxu0 %v429
    %454 = vmatprep.subr.bf16.mxu0 0
    %455 = vmatpush1.bf16.msra.mxu0 0
    %456 = vmatprep.subr.bf16.mxu0 0
    %457 = vmatpush1.bf16.msra.mxu0 0
    %458 = vmatprep.subr.bf16.mxu0 0
    %459 = vmatpush1.bf16.msra.mxu0 0
    %460 = vmatprep.subr.bf16.mxu0 0
    %461 = vmatpush1.bf16.msra.mxu0 0
    %462 = vmatprep.subr.bf16.mxu0 0
    %463 = vmatpush1.bf16.msra.mxu0 0
    %464 = vmatprep.subr.bf16.mxu0 0
    %465 = vmatpush1.bf16.msra.mxu0 0
    %466 = vmatprep.subr.bf16.mxu0 0
    %467 = vmatpush1.bf16.msra.mxu0 0
    %468 = vmatprep.subr.bf16.mxu0 0
    %469 = vmatpush1.bf16.msra.mxu0 0
    %470 = vmatprep.mubr.bf16.mxu0 0
    %471 = vmatmul.mubr.bf16.gmra.mrb[0].mxu0 %v373
    %v472 = vpop.f32.mrb[0].mxu0
    %v473 = vadd.f32 0.0, %v472
    %v474 = vpop.f32.mrb[0].mxu0
    %v475 = vpop.f32.mrb[0].mxu0
    %v476 = vadd.f32 0.0, %v475
    %v477 = vpop.f32.mrb[0].mxu0
    %478 = vdwg.mxu0
    %v479 = vmul.f32 %v473, 0.17677669
    %v480 = vmul.f32 %v476, 0.17677669
    %vm481 = vcmask 31744
    %v482 = vsel %vm481, %v479, -inf
    %v483 = vrot.slane %v482, 4
    %v484 = vmax.f32 %v482, %v483
    %v485 = vrot.slane %v484, 2
    %v486 = vmax.f32 %v484, %v485
    %v487 = vrot.slane %v486, 1
    %v488 = vmax.f32 %v486, %v487
    %v489 = vsel %vm481, %v480, -inf
    %v490 = vrot.slane %v489, 4
    %v491 = vmax.f32 %v489, %v490
    %v492 = vrot.slane %v491, 2
    %v493 = vmax.f32 %v491, %v492
    %v494 = vrot.slane %v493, 1
    %v495 = vmax.f32 %v493, %v494
    %v496 = vsub.f32 %v479, %v488
    %v497 = vsub.f32 %v480, %v495
    %v498 = vmul.f32 %v496, 1.442695
    %v499 = vpow.pop %v498
    %v500 = vmul.f32 %v497, 1.442695
    %v501 = vpow.pop %v500
    %v502 = vsel %vm481, %v499, 0.0
    %v503 = vrot.slane %v502, 4
    %v504 = vadd.f32 %v502, %v503
    %v505 = vrot.slane %v504, 2
    %v506 = vadd.f32 %v504, %v505
    %v507 = vrot.slane %v506, 1
    %v508 = vadd.f32 %v506, %v507
    %v509 = vsel %vm481, %v501, 0.0
    %v510 = vrot.slane %v509, 4
    %v511 = vadd.f32 %v509, %v510
    %v512 = vrot.slane %v511, 2
    %v513 = vadd.f32 %v511, %v512
    %v514 = vrot.slane %v513, 1
    %v515 = vadd.f32 %v513, %v514
    %v516 = vrcp.pop %v508
    %v517 = vrcp.pop %v515
    %v518 = vmul.f32 %v499, %v516
    %v519 = vmul.f32 %v501, %v517
    %v520 = vpack.c.bf16 %v519, %v518
    %v521 = vld [vmem:[%s6] sm:$0x3]
    %v523 = vsel %vm481, %v520, 0
    %vm525 = vcmask 1041408
    %v527 = vsel %vm525, %v521, 0
    %529 = vmatprep.subr.bf16.mxu0 0
    %530 = vmatpush1.bf16.msra.mxu0 %v527
    %531 = vmatprep.subr.bf16.mxu0 0
    %532 = vmatpush1.bf16.msra.mxu0 0
    %533 = vmatprep.subr.bf16.mxu0 0
    %534 = vmatpush1.bf16.msra.mxu0 0
    %535 = vmatprep.subr.bf16.mxu0 0
    %536 = vmatpush1.bf16.msra.mxu0 0
    %537 = vmatprep.subr.bf16.mxu0 0
    %538 = vmatpush1.bf16.msra.mxu0 0
    %539 = vmatprep.subr.bf16.mxu0 0
    %540 = vmatpush1.bf16.msra.mxu0 0
    %541 = vmatprep.subr.bf16.mxu0 0
    %542 = vmatpush1.bf16.msra.mxu0 0
    %543 = vmatprep.subr.bf16.mxu0 0
    %544 = vmatpush1.bf16.msra.mxu0 0
    %545 = vmatprep.subr.bf16.mxu0 0
    %546 = vmatpush1.bf16.msra.mxu0 0
    %547 = vmatprep.subr.bf16.mxu0 0
    %548 = vmatpush1.bf16.msra.mxu0 0
    %549 = vmatprep.subr.bf16.mxu0 0
    %550 = vmatpush1.bf16.msra.mxu0 0
    %551 = vmatprep.subr.bf16.mxu0 0
    %552 = vmatpush1.bf16.msra.mxu0 0
    %553 = vmatprep.subr.bf16.mxu0 0
    %554 = vmatpush1.bf16.msra.mxu0 0
    %555 = vmatprep.subr.bf16.mxu0 0
    %556 = vmatpush1.bf16.msra.mxu0 0
    %557 = vmatprep.subr.bf16.mxu0 0
    %558 = vmatpush1.bf16.msra.mxu0 0
    %559 = vmatprep.subr.bf16.mxu0 0
    %560 = vmatpush1.bf16.msra.mxu0 0
    %561 = vmatprep.mubr.bf16.mxu0 0
    %562 = vmatmul.mubr.bf16.gmra.mrb[0].mxu0 %v523
    %v563 = vpop.f32.mrb[0].mxu0
    %v564 = vadd.f32 0.0, %v563
    %v565 = vpop.f32.mrb[0].mxu0
    %v566 = vpop.f32.mrb[0].mxu0
    %v567 = vadd.f32 0.0, %v566
    %v568 = vpop.f32.mrb[0].mxu0
    %569 = vdwg.mxu0
    %v570 = vmul.f32 %v564, %v357
    %v571 = vmul.f32 %v567, %v360
    %v572 = vrot.slane %v570, 4
    %v573 = vadd.f32 %v570, %v572
    %v574 = vrot.slane %v573, 2
    %v575 = vadd.f32 %v573, %v574
    %v576 = vrot.slane %v575, 1
    %v577 = vadd.f32 %v575, %v576
    %v578 = vrot.slane %v571, 4
    %v579 = vadd.f32 %v571, %v578
    %v580 = vrot.slane %v579, 2
    %v581 = vadd.f32 %v579, %v580
    %v582 = vrot.slane %v581, 1
    %v583 = vadd.f32 %v581, %v582
    %v584 = vpack.c.bf16 %v577, %v577
    %v585 = vpack.c.bf16 %v583, %v583
    %v586 = vld [vmem:[%s7] sm:$0xf]
    %v587 = vld [vmem:[%s7 + $0x4] sm:$0xf]
    %v588 = vld [vmem:[%s7 + $0x8] sm:$0xf]
    %v589 = vld [vmem:[%s7 + $0xc] sm:$0xf]
    %v590 = vld [vmem:[%s7 + $0x10] sm:$0xf]
    %v591 = vld [vmem:[%s7 + $0x14] sm:$0xf]
    %v592 = vld [vmem:[%s7 + $0x18] sm:$0xf]
    %v593 = vld [vmem:[%s7 + $0x1c] sm:$0xf]
    %v594 = vld [vmem:[%s7 + $0x20] sm:$0xf]
    %v595 = vld [vmem:[%s7 + $0x24] sm:$0xf]
    %v596 = vld [vmem:[%s7 + $0x28] sm:$0xf]
    %v597 = vld [vmem:[%s7 + $0x2c] sm:$0xf]
    %v598 = vld [vmem:[%s7 + $0x30] sm:$0xf]
    %v599 = vld [vmem:[%s7 + $0x34] sm:$0xf]
    %v600 = vld [vmem:[%s7 + $0x38] sm:$0xf]
    %v601 = vld [vmem:[%s7 + $0x3c] sm:$0xf]
    %v602 = vld [vmem:[%s8] sm:$0x1]
    %v604 = vlaneseq
    %v605 = vshrl.u32 %v604, 7
    %v606 = vsub.s32 0, %v605
    %v607 = vrot.slane %v602, %v606
    %v611 = vunpack.c.l.b16 %v584
    %v612 = vunpack.c.l.b16 %v585
    %vm613 = vcmask 1041409
    %v614 = vsel %vm613, %v612, %v611
    %v615 = vpack.c.b16 %v614, %v614
    %v633 = vunpack.c.l.b16 %v586
    %v634 = vunpack.c.l.b16 %v587
    %v635 = vunpack.c.l.b16 %v588
    %v636 = vunpack.c.l.b16 %v589
    %v637 = vunpack.c.l.b16 %v590
    %v638 = vunpack.c.l.b16 %v591
    %v639 = vunpack.c.l.b16 %v592
    %v640 = vunpack.c.l.b16 %v593
    %v641 = vunpack.c.l.b16 %v594
    %v642 = vunpack.c.l.b16 %v595
    %v643 = vunpack.c.l.b16 %v596
    %v644 = vunpack.c.l.b16 %v597
    %v645 = vunpack.c.l.b16 %v598
    %v646 = vunpack.c.l.b16 %v599
    %v647 = vunpack.c.l.b16 %v600
    %v648 = vunpack.c.l.b16 %v601
    %v649 = vpack.c.b16 %v634, %v633
    %v650 = vpack.c.b16 %v636, %v635
    %v651 = vpack.c.b16 %v638, %v637
    %v652 = vpack.c.b16 %v640, %v639
    %v653 = vpack.c.b16 %v642, %v641
    %v654 = vpack.c.b16 %v644, %v643
    %v655 = vpack.c.b16 %v646, %v645
    %v656 = vpack.c.b16 %v648, %v647
    %665 = vmatprep.subr.bf16.mxu0 0
    %666 = vmatpush1.bf16.msra.mxu0 %v649
    %667 = vmatprep.subr.bf16.mxu0 0
    %668 = vmatpush1.bf16.msra.mxu0 %v650
    %669 = vmatprep.subr.bf16.mxu0 0
    %670 = vmatpush1.bf16.msra.mxu0 %v651
    %671 = vmatprep.subr.bf16.mxu0 0
    %672 = vmatpush1.bf16.msra.mxu0 %v652
    %673 = vmatprep.subr.bf16.mxu0 0
    %674 = vmatpush1.bf16.msra.mxu0 %v653
    %675 = vmatprep.subr.bf16.mxu0 0
    %676 = vmatpush1.bf16.msra.mxu0 %v654
    %677 = vmatprep.subr.bf16.mxu0 0
    %678 = vmatpush1.bf16.msra.mxu0 %v655
    %679 = vmatprep.subr.bf16.mxu0 0
    %680 = vmatpush1.bf16.msra.mxu0 %v656
    %681 = vmatprep.subr.bf16.mxu0 0
    %682 = vmatpush1.bf16.msra.mxu0 0
    %683 = vmatprep.subr.bf16.mxu0 0
    %684 = vmatpush1.bf16.msra.mxu0 0
    %685 = vmatprep.subr.bf16.mxu0 0
    %686 = vmatpush1.bf16.msra.mxu0 0
    %687 = vmatprep.subr.bf16.mxu0 0
    %688 = vmatpush1.bf16.msra.mxu0 0
    %689 = vmatprep.subr.bf16.mxu0 0
    %690 = vmatpush1.bf16.msra.mxu0 0
    %691 = vmatprep.subr.bf16.mxu0 0
    %692 = vmatpush1.bf16.msra.mxu0 0
    %693 = vmatprep.subr.bf16.mxu0 0
    %694 = vmatpush1.bf16.msra.mxu0 0
    %695 = vmatprep.subr.bf16.mxu0 0
    %696 = vmatpush1.bf16.msra.mxu0 0
    %697 = vmatprep.mubr.bf16.mxu0 0
    %698 = vmatmul.mubr.bf16.gmra.mrb[0].mxu0 %v615
    %v699 = vpop.f32.mrb[0].mxu0
    %v700 = vadd.f32 %v607, %v699
    %v701 = vpop.f32.mrb[0].mxu0
    %v702 = vpop.f32.mrb[0].mxu0
    %v703 = vpop.f32.mrb[0].mxu0
    %704 = vdwg.mxu0
    %v706 = vrot.slane %v700, 1
    %v709 = vadd.f32 %v99, %v700
    %v710 = vadd.f32 %v100, %v706
    %v711 = vld [vmem:[%s9] sm:$0x1]
    %v712 = vld [vmem:[%s10] sm:$0x1]
    %v715 = vrot.slane %v710, 7
    %v716 = vsel %vm613, %v715, %v709
    %v718 = vsel %vm525, %v716, 0.0
    %719 = vadd.xlane.f32.xlu0 %v718
    %v720 = vpop.xlane.xlu0 %719
    %v721 = vmul.f32 %v720, %v66
    %v723 = vrot.slane %v721, 1
    %v726 = vsub.f32 %v709, %v721
    %v727 = vsub.f32 %v710, %v723
    %v728 = vmul.f32 %v726, %v726
    %v729 = vmul.f32 %v727, %v727
    %v732 = vrot.slane %v729, 7
    %v733 = vsel %vm613, %v732, %v728
    %v735 = vsel %vm525, %v733, 0.0
    %736 = vadd.xlane.f32.xlu0 %v735
    %v737 = vpop.xlane.xlu0 %736
    %v738 = vmul.f32 %v737, %v66
    %v739 = vadd.f32 %v738, 1e-12
    %v740 = vrsqrt.pop %v739
    %v742 = vrot.slane %v740, 1
    %v745 = vmul.f32 %v726, %v740
    %v746 = vmul.f32 %v727, %v742
    %v748 = vlaneseq
    %v749 = vshrl.u32 %v748, 7
    %v750 = vsub.s32 0, %v749
    %v751 = vrot.slane %v711, %v750
    %v753 = vmul.f32 %v745, %v751
    %v754 = vmul.f32 %v746, %v751
    %v756 = vlaneseq
    %v757 = vshrl.u32 %v756, 7
    %v758 = vsub.s32 0, %v757
    %v759 = vrot.slane %v712, %v758
    %v761 = vadd.f32 %v753, %v759
    %v762 = vadd.f32 %v754, %v759
    %v763 = vpack.c.bf16 %v761, %v761
    %v764 = vpack.c.bf16 %v762, %v762
    %v765 = vld [vmem:[%s11] sm:$0xff]
    %v766 = vld [vmem:[%s11 + $0x8] sm:$0xff]
    %v767 = vld [vmem:[%s11 + $0x10] sm:$0xff]
    %v768 = vld [vmem:[%s11 + $0x18] sm:$0xff]
    %v769 = vld [vmem:[%s11 + $0x20] sm:$0xff]
    %v770 = vld [vmem:[%s11 + $0x28] sm:$0xff]
    %v771 = vld [vmem:[%s11 + $0x30] sm:$0xff]
    %v772 = vld [vmem:[%s11 + $0x38] sm:$0xff]
    %v773 = vld [vmem:[%s11 + $0x40] sm:$0xff]
    %v774 = vld [vmem:[%s11 + $0x48] sm:$0xff]
    %v775 = vld [vmem:[%s11 + $0x50] sm:$0xff]
    %v776 = vld [vmem:[%s11 + $0x58] sm:$0xff]
    %v777 = vld [vmem:[%s11 + $0x60] sm:$0xff]
    %v778 = vld [vmem:[%s11 + $0x68] sm:$0xff]
    %v779 = vld [vmem:[%s11 + $0x70] sm:$0xff]
    %v780 = vld [vmem:[%s11 + $0x78] sm:$0xff]
    %v781 = vld [vmem:[%s12] sm:$0x3]
    %v783 = vlaneseq
    %v784 = vshrl.u32 %v783, 7
    %v785 = vsub.s32 0, %v784
    %v786 = vrot.slane %v781, %v785
    %v787 = vlaneseq
    %v788 = vshrl.u32 %v787, 7
    %v789 = vsub.s32 1, %v788
    %v790 = vrot.slane %v781, %v789
    %v795 = vunpack.c.l.b16 %v763
    %v796 = vunpack.c.l.b16 %v764
    %v797 = vrot.slane %v796, 7
    %v798 = vsel %vm613, %v797, %v795
    %v799 = vpack.c.b16 %v798, %v798
    %v817 = vunpack.c.l.b16 %v765
    %v818 = vunpack.c.h.b16 %v765
    %v819 = vunpack.c.l.b16 %v766
    %v820 = vunpack.c.h.b16 %v766
    %v821 = vunpack.c.l.b16 %v767
    %v822 = vunpack.c.h.b16 %v767
    %v823 = vunpack.c.l.b16 %v768
    %v824 = vunpack.c.h.b16 %v768
    %v825 = vunpack.c.l.b16 %v769
    %v826 = vunpack.c.h.b16 %v769
    %v827 = vunpack.c.l.b16 %v770
    %v828 = vunpack.c.h.b16 %v770
    %v829 = vunpack.c.l.b16 %v771
    %v830 = vunpack.c.h.b16 %v771
    %v831 = vunpack.c.l.b16 %v772
    %v832 = vunpack.c.h.b16 %v772
    %v833 = vunpack.c.l.b16 %v773
    %v834 = vunpack.c.h.b16 %v773
    %v835 = vunpack.c.l.b16 %v774
    %v836 = vunpack.c.h.b16 %v774
    %v837 = vunpack.c.l.b16 %v775
    %v838 = vunpack.c.h.b16 %v775
    %v839 = vunpack.c.l.b16 %v776
    %v840 = vunpack.c.h.b16 %v776
    %v841 = vunpack.c.l.b16 %v777
    %v842 = vunpack.c.h.b16 %v777
    %v843 = vunpack.c.l.b16 %v778
    %v844 = vunpack.c.h.b16 %v778
    %v845 = vunpack.c.l.b16 %v779
    %v846 = vunpack.c.h.b16 %v779
    %v847 = vunpack.c.l.b16 %v780
    %v848 = vunpack.c.h.b16 %v780
    %v849 = vpack.c.b16 %v819, %v817
    %v850 = vpack.c.b16 %v820, %v818
    %v851 = vpack.c.b16 %v823, %v821
    %v852 = vpack.c.b16 %v824, %v822
    %v853 = vpack.c.b16 %v827, %v825
    %v854 = vpack.c.b16 %v828, %v826
    %v855 = vpack.c.b16 %v831, %v829
    %v856 = vpack.c.b16 %v832, %v830
    %v857 = vpack.c.b16 %v835, %v833
    %v858 = vpack.c.b16 %v836, %v834
    %v859 = vpack.c.b16 %v839, %v837
    %v860 = vpack.c.b16 %v840, %v838
    %v861 = vpack.c.b16 %v843, %v841
    %v862 = vpack.c.b16 %v844, %v842
    %v863 = vpack.c.b16 %v847, %v845
    %v864 = vpack.c.b16 %v848, %v846
    %881 = vmatprep.subr.bf16.mxu0 %v850
    %882 = vmatpush1.bf16.msra.mxu0 %v849
    %883 = vmatprep.subr.bf16.mxu0 %v852
    %884 = vmatpush1.bf16.msra.mxu0 %v851
    %885 = vmatprep.subr.bf16.mxu0 %v854
    %886 = vmatpush1.bf16.msra.mxu0 %v853
    %887 = vmatprep.subr.bf16.mxu0 %v856
    %888 = vmatpush1.bf16.msra.mxu0 %v855
    %889 = vmatprep.subr.bf16.mxu0 %v858
    %890 = vmatpush1.bf16.msra.mxu0 %v857
    %891 = vmatprep.subr.bf16.mxu0 %v860
    %892 = vmatpush1.bf16.msra.mxu0 %v859
    %893 = vmatprep.subr.bf16.mxu0 %v862
    %894 = vmatpush1.bf16.msra.mxu0 %v861
    %895 = vmatprep.subr.bf16.mxu0 %v864
    %896 = vmatpush1.bf16.msra.mxu0 %v863
    %897 = vmatprep.subr.bf16.mxu0 0
    %898 = vmatpush1.bf16.msra.mxu0 0
    %899 = vmatprep.subr.bf16.mxu0 0
    %900 = vmatpush1.bf16.msra.mxu0 0
    %901 = vmatprep.subr.bf16.mxu0 0
    %902 = vmatpush1.bf16.msra.mxu0 0
    %903 = vmatprep.subr.bf16.mxu0 0
    %904 = vmatpush1.bf16.msra.mxu0 0
    %905 = vmatprep.subr.bf16.mxu0 0
    %906 = vmatpush1.bf16.msra.mxu0 0
    %907 = vmatprep.subr.bf16.mxu0 0
    %908 = vmatpush1.bf16.msra.mxu0 0
    %909 = vmatprep.subr.bf16.mxu0 0
    %910 = vmatpush1.bf16.msra.mxu0 0
    %911 = vmatprep.subr.bf16.mxu0 0
    %912 = vmatpush1.bf16.msra.mxu0 0
    %913 = vmatprep.mubr.bf16.mxu0 0
    %914 = vmatmul.mubr.bf16.gmra.mrb[0].mxu0 %v799
    %v915 = vpop.f32.mrb[0].mxu0
    %v916 = vadd.f32 %v786, %v915
    %v917 = vpop.f32.mrb[0].mxu0
    %v918 = vadd.f32 %v790, %v917
    %v919 = vpop.f32.mrb[0].mxu0
    %v920 = vpop.f32.mrb[0].mxu0
    %921 = vdwg.mxu0
    %v922 = vmul.f32 %v916, %v916
    %v923 = vmul.f32 %v918, %v918
    %v924 = vmul.f32 %v916, %v922
    %v925 = vmul.f32 %v918, %v923
    %v926 = vmul.f32 %v924, 0.044715
    %v927 = vmul.f32 %v925, 0.044715
    %v928 = vadd.f32 %v916, %v926
    %v929 = vadd.f32 %v918, %v927
    %v930 = vmul.f32 %v928, 0.7978846
    %v931 = vmul.f32 %v929, 0.7978846
    %v932 = vtanh.pop %v930
    %v933 = vtanh.pop %v931
    %v934 = vadd.f32 %v932, 1.0
    %v935 = vadd.f32 %v933, 1.0
    %v936 = vmul.f32 %v934, 0.5
    %v937 = vmul.f32 %v935, 0.5
    %v938 = vmul.f32 %v916, %v936
    %v939 = vmul.f32 %v918, %v937
    %v940 = vpack.c.bf16 %v938, %v938
    %v941 = vpack.c.bf16 %v939, %v939
    %v942 = vld [vmem:[%s13] sm:$0xf]
    %v943 = vld [vmem:[%s13 + $0x4] sm:$0xf]
    %v944 = vld [vmem:[%s13 + $0x8] sm:$0xf]
    %v945 = vld [vmem:[%s13 + $0xc] sm:$0xf]
    %v946 = vld [vmem:[%s13 + $0x10] sm:$0xf]
    %v947 = vld [vmem:[%s13 + $0x14] sm:$0xf]
    %v948 = vld [vmem:[%s13 + $0x18] sm:$0xf]
    %v949 = vld [vmem:[%s13 + $0x1c] sm:$0xf]
    %v950 = vld [vmem:[%s13 + $0x20] sm:$0xf]
    %v951 = vld [vmem:[%s13 + $0x24] sm:$0xf]
    %v952 = vld [vmem:[%s13 + $0x28] sm:$0xf]
    %v953 = vld [vmem:[%s13 + $0x2c] sm:$0xf]
    %v954 = vld [vmem:[%s13 + $0x30] sm:$0xf]
    %v955 = vld [vmem:[%s13 + $0x34] sm:$0xf]
    %v956 = vld [vmem:[%s13 + $0x38] sm:$0xf]
    %v957 = vld [vmem:[%s13 + $0x3c] sm:$0xf]
    %v958 = vld [vmem:[%s13 + $0x40] sm:$0xf]
    %v959 = vld [vmem:[%s13 + $0x44] sm:$0xf]
    %v960 = vld [vmem:[%s13 + $0x48] sm:$0xf]
    %v961 = vld [vmem:[%s13 + $0x4c] sm:$0xf]
    %v962 = vld [vmem:[%s13 + $0x50] sm:$0xf]
    %v963 = vld [vmem:[%s13 + $0x54] sm:$0xf]
    %v964 = vld [vmem:[%s13 + $0x58] sm:$0xf]
    %v965 = vld [vmem:[%s13 + $0x5c] sm:$0xf]
    %v966 = vld [vmem:[%s13 + $0x60] sm:$0xf]
    %v967 = vld [vmem:[%s13 + $0x64] sm:$0xf]
    %v968 = vld [vmem:[%s13 + $0x68] sm:$0xf]
    %v969 = vld [vmem:[%s13 + $0x6c] sm:$0xf]
    %v970 = vld [vmem:[%s13 + $0x70] sm:$0xf]
    %v971 = vld [vmem:[%s13 + $0x74] sm:$0xf]
    %v972 = vld [vmem:[%s13 + $0x78] sm:$0xf]
    %v973 = vld [vmem:[%s13 + $0x7c] sm:$0xf]
    %v974 = vld [vmem:[%s14] sm:$0x1]
    %v976 = vlaneseq
    %v977 = vshrl.u32 %v976, 7
    %v978 = vsub.s32 0, %v977
    %v979 = vrot.slane %v974, %v978
    %v1013 = vunpack.c.l.b16 %v942
    %v1014 = vunpack.c.l.b16 %v943
    %v1015 = vunpack.c.l.b16 %v944
    %v1016 = vunpack.c.l.b16 %v945
    %v1017 = vunpack.c.l.b16 %v946
    %v1018 = vunpack.c.l.b16 %v947
    %v1019 = vunpack.c.l.b16 %v948
    %v1020 = vunpack.c.l.b16 %v949
    %v1021 = vunpack.c.l.b16 %v950
    %v1022 = vunpack.c.l.b16 %v951
    %v1023 = vunpack.c.l.b16 %v952
    %v1024 = vunpack.c.l.b16 %v953
    %v1025 = vunpack.c.l.b16 %v954
    %v1026 = vunpack.c.l.b16 %v955
    %v1027 = vunpack.c.l.b16 %v956
    %v1028 = vunpack.c.l.b16 %v957
    %v1029 = vunpack.c.l.b16 %v958
    %v1030 = vunpack.c.l.b16 %v959
    %v1031 = vunpack.c.l.b16 %v960
    %v1032 = vunpack.c.l.b16 %v961
    %v1033 = vunpack.c.l.b16 %v962
    %v1034 = vunpack.c.l.b16 %v963
    %v1035 = vunpack.c.l.b16 %v964
    %v1036 = vunpack.c.l.b16 %v965
    %v1037 = vunpack.c.l.b16 %v966
    %v1038 = vunpack.c.l.b16 %v967
    %v1039 = vunpack.c.l.b16 %v968
    %v1040 = vunpack.c.l.b16 %v969
    %v1041 = vunpack.c.l.b16 %v970
    %v1042 = vunpack.c.l.b16 %v971
    %v1043 = vunpack.c.l.b16 %v972
    %v1044 = vunpack.c.l.b16 %v973
    %v1045 = vpack.c.b16 %v1014, %v1013
    %v1046 = vpack.c.b16 %v1016, %v1015
    %v1047 = vpack.c.b16 %v1018, %v1017
    %v1048 = vpack.c.b16 %v1020, %v1019
    %v1049 = vpack.c.b16 %v1022, %v1021
    %v1050 = vpack.c.b16 %v1024, %v1023
    %v1051 = vpack.c.b16 %v1026, %v1025
    %v1052 = vpack.c.b16 %v1028, %v1027
    %v1053 = vpack.c.b16 %v1030, %v1029
    %v1054 = vpack.c.b16 %v1032, %v1031
    %v1055 = vpack.c.b16 %v1034, %v1033
    %v1056 = vpack.c.b16 %v1036, %v1035
    %v1057 = vpack.c.b16 %v1038, %v1037
    %v1058 = vpack.c.b16 %v1040, %v1039
    %v1059 = vpack.c.b16 %v1042, %v1041
    %v1060 = vpack.c.b16 %v1044, %v1043
    %1077 = vmatprep.subr.bf16.mxu0 0
    %1078 = vmatpush1.bf16.msra.mxu0 %v1045
    %1079 = vmatprep.subr.bf16.mxu0 0
    %1080 = vmatpush1.bf16.msra.mxu0 %v1046
    %1081 = vmatprep.subr.bf16.mxu0 0
    %1082 = vmatpush1.bf16.msra.mxu0 %v1047
    %1083 = vmatprep.subr.bf16.mxu0 0
    %1084 = vmatpush1.bf16.msra.mxu0 %v1048
    %1085 = vmatprep.subr.bf16.mxu0 0
    %1086 = vmatpush1.bf16.msra.mxu0 %v1049
    %1087 = vmatprep.subr.bf16.mxu0 0
    %1088 = vmatpush1.bf16.msra.mxu0 %v1050
    %1089 = vmatprep.subr.bf16.mxu0 0
    %1090 = vmatpush1.bf16.msra.mxu0 %v1051
    %1091 = vmatprep.subr.bf16.mxu0 0
    %1092 = vmatpush1.bf16.msra.mxu0 %v1052
    %1093 = vmatprep.subr.bf16.mxu0 0
    %1094 = vmatpush1.bf16.msra.mxu0 %v1053
    %1095 = vmatprep.subr.bf16.mxu0 0
    %1096 = vmatpush1.bf16.msra.mxu0 %v1054
    %1097 = vmatprep.subr.bf16.mxu0 0
    %1098 = vmatpush1.bf16.msra.mxu0 %v1055
    %1099 = vmatprep.subr.bf16.mxu0 0
    %1100 = vmatpush1.bf16.msra.mxu0 %v1056
    %1101 = vmatprep.subr.bf16.mxu0 0
    %1102 = vmatpush1.bf16.msra.mxu0 %v1057
    %1103 = vmatprep.subr.bf16.mxu0 0
    %1104 = vmatpush1.bf16.msra.mxu0 %v1058
    %1105 = vmatprep.subr.bf16.mxu0 0
    %1106 = vmatpush1.bf16.msra.mxu0 %v1059
    %1107 = vmatprep.subr.bf16.mxu0 0
    %1108 = vmatpush1.bf16.msra.mxu0 %v1060
    %1109 = vmatprep.mubr.bf16.mxu0 %v941
    %1110 = vmatmul.mubr.bf16.gmra.mrb[0].mxu0 %v940
    %v1111 = vpop.f32.mrb[0].mxu0
    %v1112 = vadd.f32 %v979, %v1111
    %v1113 = vpop.f32.mrb[0].mxu0
    %v1114 = vpop.f32.mrb[0].mxu0
    %v1115 = vpop.f32.mrb[0].mxu0
    %1116 = vdwg.mxu0
    %v1118 = vrot.slane %v1112, 1
    %v1121 = vadd.f32 %v761, %v1112
    %v1122 = vadd.f32 %v762, %v1118
    %v1123 = vld [vmem:[%s15] sm:$0x1]
    %v1124 = vld [vmem:[%s16] sm:$0x1]
    %v1127 = vrot.slane %v1122, 7
    %v1128 = vsel %vm613, %v1127, %v1121
    %v1130 = vsel %vm525, %v1128, 0.0
    %1131 = vadd.xlane.f32.xlu0 %v1130
    %v1132 = vpop.xlane.xlu0 %1131
    %v1133 = vmul.f32 %v1132, %v66
    %v1135 = vrot.slane %v1133, 1
    %v1138 = vsub.f32 %v1121, %v1133
    %v1139 = vsub.f32 %v1122, %v1135
    %v1140 = vmul.f32 %v1138, %v1138
    %v1141 = vmul.f32 %v1139, %v1139
    %v1144 = vrot.slane %v1141, 7
    %v1145 = vsel %vm613, %v1144, %v1140
    %v1147 = vsel %vm525, %v1145, 0.0
    %1148 = vadd.xlane.f32.xlu0 %v1147
    %v1149 = vpop.xlane.xlu0 %1148
    %v1150 = vmul.f32 %v1149, %v66
    %v1151 = vadd.f32 %v1150, 1e-12
    %v1152 = vrsqrt.pop %v1151
    %v1154 = vrot.slane %v1152, 1
    %v1157 = vmul.f32 %v1138, %v1152
    %v1158 = vmul.f32 %v1139, %v1154
    %v1160 = vlaneseq
    %v1161 = vshrl.u32 %v1160, 7
    %v1162 = vsub.s32 0, %v1161
    %v1163 = vrot.slane %v1123, %v1162
    %v1165 = vmul.f32 %v1157, %v1163
    %v1166 = vmul.f32 %v1158, %v1163
    %v1168 = vlaneseq
    %v1169 = vshrl.u32 %v1168, 7
    %v1170 = vsub.s32 0, %v1169
    %v1171 = vrot.slane %v1124, %v1170
    %v1173 = vadd.f32 %v1165, %v1171
    %v1174 = vadd.f32 %v1166, %v1171
    %v1177 = vrot.slane %v1174, 7
    %v1178 = vsel %vm613, %v1177, %v1173
    %1180 = vst [vmem:[#allocation2] sm:$0x3] %v1178
    // Predicated region
    $region70: #{language_embedding_forward.1} parent=1 // pred_check
      _
    $region71: #{language_embedding_forward.1} parent=1 // pred_check_branch
      %1182 = sbr.rel (0) target = $region73
    $region72: #{language_embedding_forward.1} parent=1 // pred_region
      %s1184 = ssub.s32 32, 32
      %1185 = vsyncadd [#allocation3], %s1184
      %s1187 = sshll.u32 [#allocation2], 4
      %s1188 = int_to_ptr.vmem [resolvable:$true] %s1187
      %1190 = dma.vmem_to_hbm [thread:$0]  %s1188, 32, %s17, [#allocation3]
    $region73: #{language_embedding_forward.1} parent=1 // pred_fallthru
      _
    // Predicated region
    $region74: #{language_embedding_forward.1} parent=1 // pred_check
      _
    $region75: #{language_embedding_forward.1} parent=1 // pred_check_branch
      %1192 = sbr.rel (0) target = $region77
    $region76: #{language_embedding_forward.1} parent=1 // pred_region
      %1193 = dma.done [#allocation3], 32
    $region77: #{language_embedding_forward.1} parent=1 // pred_fallthru
      _
    %1194 = vsyncpa [#allocation3], 1

</llo_original>
